<compile_context>
chip_gen: v6e
topology: v6e:2x2x1
jax: 0.10.0
libtpu: 0.0.40
codegen_flags: <defaults>
</compile_context>

<pallas_src>
import jax
import jax.numpy as jnp
from jax.experimental import pallas as pl
from jax.experimental.pallas import tpu as pltpu


WIDTH = 512                      # lane-dense last dim (multiple of 128)
BLOCK_BYTES = 4 * 1024 * 1024    # ~4 MiB per block; x4 buffers = 16 MiB VMEM
VMEM_LIMIT = 32 * 1024 * 1024    # safe scoped-VMEM limit on v5e/v6e/v7x


def _sublane(itemsize):
    """Packed sublane granularity per dtype width."""
    return {4: 8, 2: 16, 1: 32}.get(itemsize, 8)


def _round_up(a, b):
    return -(-a // b) * b


def _h_sigmoid_kernel(x_ref, o_ref):
    """Elementwise ReLU6(x + 3) * (1/6) on one (block_rows, WIDTH) tile."""
    x = x_ref[...]
    y = jnp.minimum(jnp.maximum(x + 3.0, 0.0), 6.0) * (1.0 / 6.0)
    o_ref[...] = y.astype(o_ref.dtype)


def _h_sigmoid_jax(x):
    """Tiny-tail fallback in plain JAX (same formula, same dtype)."""
    return (jnp.minimum(jnp.maximum(x + 3.0, 0.0), 6.0) * (1.0 / 6.0)).astype(x.dtype)


def _run_2d(x2d):
    """Run the kernel over a (rows, WIDTH) slab with lane-dense tiles."""
    rows, width = x2d.shape
    itemsize = jnp.dtype(x2d.dtype).itemsize
    sub = _sublane(itemsize)

    target_rows = max(sub, (BLOCK_BYTES // (width * itemsize)) // sub * sub)
    if rows > target_rows:
        block_rows = target_rows
    elif rows >= 2 * sub:
        # Force >= 2 grid steps so both v7x TensorCores get work.
        block_rows = _round_up(pl.cdiv(rows, 2), sub)
    else:
        block_rows = rows  # single block equal to full extent (always legal)

    grid = (pl.cdiv(rows, block_rows),)
    spec = pl.BlockSpec((block_rows, width), lambda i: (i, 0))
    n_elems = rows * width

    return pl.pallas_call(
        _h_sigmoid_kernel,
        out_shape=jax.ShapeDtypeStruct((rows, width), x2d.dtype),
        grid=grid,
        in_specs=[spec],
        out_specs=spec,
        compiler_params=pltpu.CompilerParams(
            dimension_semantics=("parallel",),
            vmem_limit_bytes=VMEM_LIMIT),
        cost_estimate=pl.CostEstimate(
            flops=4 * n_elems,
            transcendentals=0,
            bytes_accessed=2 * n_elems * itemsize),
    )(x2d)


def h_sigmoid_forward(x):
    """Apply h_sigmoid elementwise to an arbitrarily-shaped array."""
    orig_shape = x.shape
    n = x.size
    if n == 0:
        return x
    flat = x.reshape(-1)
    itemsize = jnp.dtype(x.dtype).itemsize
    sub = _sublane(itemsize)

    # Fast path: no padding, no slicing, no extra HBM passes.
    if n % WIDTH == 0:
        return _run_2d(flat.reshape(n // WIDTH, WIDTH)).reshape(orig_shape)

    # Ragged size: kernel on the aligned bulk, plain JAX on the small tail.
    align = sub * WIDTH
    bulk = (n // align) * align
    if bulk == 0:
        return _h_sigmoid_jax(flat).reshape(orig_shape)
    bulk_out = _run_2d(flat[:bulk].reshape(bulk // WIDTH, WIDTH)).reshape(-1)
    tail_out = _h_sigmoid_jax(flat[bulk:])
    return jnp.concatenate([bulk_out, tail_out]).reshape(orig_shape)


def reference_forward(x):
    """Pure-JAX reference: ReLU6(x + 3) / 6 (matches the PyTorch module)."""
    return jnp.clip(x + 3.0, 0.0, 6.0) / 6.0


if __name__ == "__main__":
    key = jax.random.PRNGKey(0)

    # Required small shape (single-block path).
    N, C, H, W = 2, 4, 16, 16
    x = 8.0 * jax.random.normal(key, (N, C, H, W), jnp.float32)  # hits both clip edges
    out = jax.block_until_ready(h_sigmoid_forward(x))
    ref = reference_forward(x)
    assert out.shape == x.shape and out.dtype == x.dtype
    assert jnp.allclose(out, ref, atol=1e-6, rtol=1e-6), (
        float(jnp.max(jnp.abs(out - ref))))

    # Slightly larger shape to exercise the multi-block "parallel" grid path.
    x2 = 8.0 * jax.random.normal(key, (4, 8, 32, 32), jnp.float32)
    out2 = jax.block_until_ready(h_sigmoid_forward(x2))
    ref2 = reference_forward(x2)
    assert jnp.allclose(out2, ref2, atol=1e-6, rtol=1e-6), (
        float(jnp.max(jnp.abs(out2 - ref2))))

    print("KERNEL_OK")
</pallas_src>

<mosaic_0001>
module attributes {stable_mosaic.version = 11 : i64} {
  func.func @_h_sigmoid_kernel(%arg0: i32, %arg1: memref<4x512xf32, #tpu.memory_space<vmem>>, %arg2: memref<4x512xf32, #tpu.memory_space<vmem>>) attributes {dimension_semantics = [#tpu.dimension_semantics<parallel>], iteration_bounds = array<i64: 1>, scalar_prefetch = 0 : i64, scratch_operands = 0 : i64, tpu.core_type = #tpu.core_type<tc>, window_params = [{transform_indices = @transform_0, window_bounds = array<i64: 4, 512>}, {transform_indices = @transform_1, window_bounds = array<i64: 4, 512>}]} {
    %c0 = arith.constant 0 : index
    %c0_0 = arith.constant 0 : index
    %0 = vector.load %arg1[%c0, %c0_0] : memref<4x512xf32, #tpu.memory_space<vmem>>, vector<4x512xf32>
    %cst = arith.constant 3.000000e+00 : f32
    %1 = vector.broadcast %cst : f32 to vector<4x512xf32>
    %2 = arith.addf %0, %1 : vector<4x512xf32>
    %cst_1 = arith.constant 0.000000e+00 : f32
    %3 = vector.broadcast %cst_1 : f32 to vector<4x512xf32>
    %4 = arith.maximumf %2, %3 : vector<4x512xf32>
    %cst_2 = arith.constant 6.000000e+00 : f32
    %5 = vector.broadcast %cst_2 : f32 to vector<4x512xf32>
    %6 = arith.minimumf %4, %5 : vector<4x512xf32>
    %cst_3 = arith.constant 0.166666672 : f32
    %7 = vector.broadcast %cst_3 : f32 to vector<4x512xf32>
    %8 = arith.mulf %6, %7 : vector<4x512xf32>
    %c0_4 = arith.constant 0 : index
    %c0_5 = arith.constant 0 : index
    %9 = vector.load %arg2[%c0_4, %c0_5] : memref<4x512xf32, #tpu.memory_space<vmem>>, vector<4x512xf32>
    tpu.vector_store %arg2[%c0_4, %c0_5], %8 {strides = array<i32>} : memref<4x512xf32, #tpu.memory_space<vmem>>, vector<4x512xf32>,
    return
  }
  func.func @transform_0(%arg0: i32) -> (i32, i32) {
    %c0_i32 = arith.constant 0 : i32
    %c0_i32_0 = arith.constant 0 : i32
    return %arg0, %c0_i32 : i32, i32
  }
  func.func @transform_1(%arg0: i32) -> (i32, i32) {
    %c0_i32 = arith.constant 0 : i32
    %c0_i32_0 = arith.constant 0 : i32
    return %arg0, %c0_i32 : i32, i32
  }
}

</mosaic_0001>

<llo_original>
// kernel: tpu_custom_call.1
$region0: #{tpu_custom_call.1}
  #allocation0 [shape = 'u32[]', space=smem, size = 0x4, offset = 0x4, fixed_abs, tag = 'smem constant byte address 0x4 - core index']
  #allocation1 [shape = 'u32[144,128]{1,0:T(1,128)}', space=vmem, size = 0x12000, scoped, tag = 'internal scratch']
  %s0 = inlined_call_operand.hbm [shape: f32[4,512], index: 0, kind: input, shape index: {}]
  %s1 = inlined_call_operand.hbm [shape: f32[4,512], index: 1, kind: output, shape index: {}]
  %s2 = sld [smem:[#allocation0]]
  $region18: #{tpu_custom_call.1} parent=0
    _
  %s4 = ssub.s32 1, %s2
  %s5 = scalar_select 0, %s4, %s2
  $region1: #{tpu_custom_call.1} parent=0
    #allocation2 [shape = 'u8[8192]{0}', space=vmem, size = 0x2000, scoped, tag = 'input window, operand 0, single buffered']
    #allocation3 [shape = 's32[1]{0}', space=sflag, size = 0x4, scoped, tag = 'scoped memory for tpu_custom_call.1']
    #allocation4 [shape = 's32[1]{0}', space=sflag, size = 0x4, scoped, tag = 'scoped memory for tpu_custom_call.1']
    #allocation5 [shape = 'u8[8192]{0}', space=vmem, size = 0x2000, scoped, tag = 'output window, operand 0, single buffered']
    %6 = vsyncpa [#allocation3], 0
    %7 = vsyncpa [#allocation4], 0
    // Predicated region
    $region2: #{tpu_custom_call.1} parent=1 // pred_check
      _
    $region3: #{tpu_custom_call.1} parent=1 // pred_check_branch
      %9 = sbr.rel (0) target = $region5
    $region4: #{tpu_custom_call.1} parent=1 // pred_region
      %s11 = ssub.s32 256, 256
      %12 = vsyncadd [#allocation3], %s11
      %s14 = sshll.u32 [#allocation2], 4
      %s15 = int_to_ptr.vmem [resolvable:$true] %s14
      %17 = dma.hbm_to_vmem [thread:$0]  %s0, 256, %s15, [#allocation3]
    $region5: #{tpu_custom_call.1} parent=1 // pred_fallthru
      _
    // Predicated region
    $region6: #{tpu_custom_call.1} parent=1 // pred_check
      _
    $region7: #{tpu_custom_call.1} parent=1 // pred_check_branch
      %19 = sbr.rel (0) target = $region9
    $region8: #{tpu_custom_call.1} parent=1 // pred_region
      %20 = dma.done [#allocation3], 256
    $region9: #{tpu_custom_call.1} parent=1 // pred_fallthru
      _
    %v21 = vld [vmem:[#allocation2] sm:$0xff]
    %v22 = vld [vmem:[#allocation2 + $0x8] sm:$0xff]
    %v23 = vadd.f32 %v21, 3.0
    %v24 = vadd.f32 %v22, 3.0
    %v25 = vmax.f32 %v23, 0.0
    %v26 = vmax.f32 %v24, 0.0
    %v27 = vmin.f32 %v25, 6.0
    %v28 = vmin.f32 %v26, 6.0
    %v29 = vmul.f32 %v27, 0.16666667
    %v30 = vmul.f32 %v28, 0.16666667
    %31 = vst [vmem:[#allocation5] sm:$0xff] %v29
    %32 = vst [vmem:[#allocation5 + $0x8] sm:$0xff] %v30
    // Predicated region
    $region10: #{tpu_custom_call.1} parent=1 // pred_check
      _
    $region11: #{tpu_custom_call.1} parent=1 // pred_check_branch
      %34 = sbr.rel (0) target = $region13
    $region12: #{tpu_custom_call.1} parent=1 // pred_region
      %s36 = ssub.s32 256, 256
      %37 = vsyncadd [#allocation4], %s36
      %s39 = sshll.u32 [#allocation5], 4
      %s40 = int_to_ptr.vmem [resolvable:$true] %s39
      %42 = dma.vmem_to_hbm [thread:$0]  %s40, 256, %s1, [#allocation4]
    $region13: #{tpu_custom_call.1} parent=1 // pred_fallthru
      _
    // Predicated region
    $region14: #{tpu_custom_call.1} parent=1 // pred_check
      _
    $region15: #{tpu_custom_call.1} parent=1 // pred_check_branch
      %44 = sbr.rel (0) target = $region17
    $region16: #{tpu_custom_call.1} parent=1 // pred_region
      %45 = dma.done [#allocation4], 256
    $region17: #{tpu_custom_call.1} parent=1 // pred_fallthru
      _
    %46 = vsyncpa [#allocation3], 1
    %47 = vsyncpa [#allocation4], 1

</llo_original>
